<compile_context>
chip_gen: v7x
topology: tpu7x:2x2x1
jax: 0.10.0
libtpu: 0.0.40
codegen_flags: <defaults>
</compile_context>

<pallas_src>
import jax
import jax.numpy as jnp
from jax.experimental import pallas as pl
from jax.experimental.pallas import tpu as pltpu


def _round_up(x, m):
    return (x + m - 1) // m * m


def _mlp_kernel(x_ref, w1_ref, b1_ref, w2_ref, b2_ref, o_ref):
    # x: (TM, D) f32 | w1: (D, Hp) compute_dtype | b1: (1, Hp) f32
    # w2: (Hp, O) compute_dtype | b2: (1, O) f32 | o: (TM, O) f32
    x = x_ref[...].astype(w1_ref.dtype)          # cast in-register (VPU filler under the DMA)
    h = jnp.dot(x, w1_ref[...], preferred_element_type=jnp.float32)
    h = jnp.maximum(h + b1_ref[...], 0.0)        # bias + ReLU in f32
    # Dropout(p=0.1849): identity at inference time.
    y = jnp.dot(h.astype(w2_ref.dtype), w2_ref[...],
                preferred_element_type=jnp.float32)
    o_ref[...] = (y + b2_ref[...]).astype(o_ref.dtype)


def make_neural_net_forward(w1, b1, w2, b2, *, tm=2048, compute_dtype=jnp.bfloat16):
    """Build the forward fn, padding/casting parameters exactly once.

    w1: (input_dim, 224), b1: (224,), w2: (224, output_dim), b2: (output_dim,)
    Returns forward(x) -> (B, output_dim) float32, x of shape (B, input_dim).
    tm: batch tile. ~2048 for v5e/v6e; ~8192-16384 on v7x (ensure >= 2 grid steps so the
    parallel batch axis shards across both TensorCores).
    """
    D, H = w1.shape
    O = w2.shape[1]
    H_pad = _round_up(H, 128)   # 224 -> 256: clean MXU column tiles

    # One-time parameter prep (hoisted off the per-call path). Zero-padding the hidden
    # columns/rows is exact: zeros survive ReLU and multiply zero rows of w2.
    w1p = jnp.pad(w1, ((0, 0), (0, H_pad - H))).astype(compute_dtype)
    b1p = jnp.pad(b1, (0, H_pad - H)).reshape(1, H_pad).astype(jnp.float32)
    w2p = jnp.pad(w2, ((0, H_pad - H), (0, 0))).astype(compute_dtype)   # (H_pad, O), O unpadded
    b2p = b2.reshape(1, O).astype(jnp.float32)

    @jax.jit
    def forward(x):
        B = x.shape[0]
        x32 = x.astype(jnp.float32)

        if B <= tm:
            # Single tile: skip grid / software-pipeline machinery entirely.
            vmem = pl.BlockSpec(memory_space=pltpu.MemorySpace.VMEM)
            return pl.pallas_call(
                _mlp_kernel,
                out_shape=jax.ShapeDtypeStruct((B, O), jnp.float32),
                in_specs=[vmem, vmem, vmem, vmem, vmem],
                out_specs=vmem,
            )(x32, w1p, b1p, w2p, b2p)

        # Tile only the batch axis; weights stay resident (constant block index).
        # Ragged last block handled by Pallas (OOB reads are junk rows whose outputs are
        # dropped on writeback; rows are independent so valid rows are unaffected).
        return pl.pallas_call(
            _mlp_kernel,
            out_shape=jax.ShapeDtypeStruct((B, O), jnp.float32),
            grid=(pl.cdiv(B, tm),),
            in_specs=[
                pl.BlockSpec((tm, D), lambda i: (i, 0)),
                pl.BlockSpec((D, H_pad), lambda i: (0, 0)),
                pl.BlockSpec((1, H_pad), lambda i: (0, 0)),
                pl.BlockSpec((H_pad, O), lambda i: (0, 0)),
                pl.BlockSpec((1, O), lambda i: (0, 0)),
            ],
            out_specs=pl.BlockSpec((tm, O), lambda i: (i, 0)),
            compiler_params=pltpu.CompilerParams(
                dimension_semantics=("parallel",),
            ),
        )(x32, w1p, b1p, w2p, b2p)

    return forward


if __name__ == "__main__":
    key = jax.random.PRNGKey(0)
    input_dim = 32       # X_combined.shape[1] stand-in
    hidden = 224         # fixed by the module
    output_dim = 8       # number of classes stand-in

    kw1, kb1, kw2, kb2, kx, kx2 = jax.random.split(key, 6)
    # Deterministic parameter init (PyTorch-style uniform fan-in bounds, fixed seed).
    bound1 = 1.0 / (input_dim ** 0.5)
    w1 = jax.random.uniform(kw1, (input_dim, hidden), jnp.float32, -bound1, bound1)
    b1 = jax.random.uniform(kb1, (hidden,), jnp.float32, -bound1, bound1)
    bound2 = 1.0 / (hidden ** 0.5)
    w2 = jax.random.uniform(kw2, (hidden, output_dim), jnp.float32, -bound2, bound2)
    b2 = jax.random.uniform(kb2, (output_dim,), jnp.float32, -bound2, bound2)

    def ref_fn(xx):
        return jnp.maximum(xx @ w1 + b1, 0.0) @ w2 + b2

    # --- Case 1: small batch -> single-tile (no-grid) path, production tm default ---
    forward = make_neural_net_forward(w1, b1, w2, b2)   # tm=2048 default
    batch = 8
    x = jax.random.normal(kx, (batch, input_dim), dtype=jnp.float32)
    out = forward(x)
    jax.block_until_ready(out)
    assert out.shape == (batch, output_dim)
    # bf16 MXU inputs with f32 accumulation -> loose tolerance vs f32 reference.
    assert jnp.allclose(out, ref_fn(x), atol=5e-2, rtol=5e-2)

    # --- Case 2: grid path correctness check (tiny tm ONLY to exercise batch tiling and the
    #     ragged last block at small shapes; production tm stays at 2048+) ---
    forward_tiled = make_neural_net_forward(w1, b1, w2, b2, tm=64)
    batch2 = 200   # not a multiple of tm -> partial last block
    x2 = jax.random.normal(kx2, (batch2, input_dim), dtype=jnp.float32)
    out2 = forward_tiled(x2)
    jax.block_until_ready(out2)
    assert out2.shape == (batch2, output_dim)
    assert jnp.allclose(out2, ref_fn(x2), atol=5e-2, rtol=5e-2)

    print("KERNEL_OK")
</pallas_src>

<mosaic_0001>
module attributes {stable_mosaic.version = 11 : i64} {
  func.func @_mlp_kernel(%arg0: memref<8x32xf32, #tpu.memory_space<vmem>>, %arg1: memref<32x256xbf16, #tpu.memory_space<vmem>>, %arg2: memref<1x256xf32, #tpu.memory_space<vmem>>, %arg3: memref<256x8xbf16, #tpu.memory_space<vmem>>, %arg4: memref<1x8xf32, #tpu.memory_space<vmem>>, %arg5: memref<8x8xf32, #tpu.memory_space<vmem>>) attributes {dimension_semantics = [], scalar_prefetch = 0 : i64, scratch_operands = 0 : i64, tpu.core_type = #tpu.core_type<tc>} {
    %c0 = arith.constant 0 : index
    %c0_0 = arith.constant 0 : index
    %0 = vector.load %arg0[%c0, %c0_0] : memref<8x32xf32, #tpu.memory_space<vmem>>, vector<8x32xf32>
    %1 = arith.truncf %0 : vector<8x32xf32> to vector<8x32xbf16>
    %c0_1 = arith.constant 0 : index
    %c0_2 = arith.constant 0 : index
    %2 = vector.load %arg1[%c0_1, %c0_2] : memref<32x256xbf16, #tpu.memory_space<vmem>>, vector<32x256xbf16>
    %cst = arith.constant dense<0.000000e+00> : vector<8x256xf32>
    %3 = tpu.matmul %1, %2, %cst {dimension_numbers = #tpu.dot_dimension_numbers<[1], [0], [0], [1], [0, 0, 1, 1], [], []>} : vector<8x32xbf16>, vector<32x256xbf16>, vector<8x256xf32> -> vector<8x256xf32>
    %c0_3 = arith.constant 0 : index
    %c0_4 = arith.constant 0 : index
    %4 = vector.load %arg2[%c0_3, %c0_4] : memref<1x256xf32, #tpu.memory_space<vmem>>, vector<1x256xf32>
    %5 = vector.broadcast %4 : vector<1x256xf32> to vector<8x256xf32>
    %6 = arith.addf %3, %5 : vector<8x256xf32>
    %cst_5 = arith.constant 0.000000e+00 : f32
    %7 = vector.broadcast %cst_5 : f32 to vector<8x256xf32>
    %8 = arith.maximumf %6, %7 : vector<8x256xf32>
    %9 = arith.truncf %8 : vector<8x256xf32> to vector<8x256xbf16>
    %c0_6 = arith.constant 0 : index
    %c0_7 = arith.constant 0 : index
    %10 = vector.load %arg3[%c0_6, %c0_7] : memref<256x8xbf16, #tpu.memory_space<vmem>>, vector<256x8xbf16>
    %cst_8 = arith.constant dense<0.000000e+00> : vector<8x8xf32>
    %11 = tpu.matmul %9, %10, %cst_8 {dimension_numbers = #tpu.dot_dimension_numbers<[1], [0], [0], [1], [0, 0, 1, 1], [], []>} : vector<8x256xbf16>, vector<256x8xbf16>, vector<8x8xf32> -> vector<8x8xf32>
    %c0_9 = arith.constant 0 : index
    %c0_10 = arith.constant 0 : index
    %12 = vector.load %arg4[%c0_9, %c0_10] : memref<1x8xf32, #tpu.memory_space<vmem>>, vector<1x8xf32>
    %13 = vector.broadcast %12 : vector<1x8xf32> to vector<8x8xf32>
    %14 = arith.addf %11, %13 : vector<8x8xf32>
    %c0_11 = arith.constant 0 : index
    %c0_12 = arith.constant 0 : index
    %15 = vector.load %arg5[%c0_11, %c0_12] : memref<8x8xf32, #tpu.memory_space<vmem>>, vector<8x8xf32>
    tpu.vector_store %arg5[%c0_11, %c0_12], %14 {strides = array<i32>} : memref<8x8xf32, #tpu.memory_space<vmem>>, vector<8x8xf32>,
    return
  }
}

</mosaic_0001>

<llo_original>
// kernel: forward.1
$region0: #{forward.1}
  #allocation0 [shape = 'u32[]', space=smem, size = 0x4, offset = 0x4, fixed_abs, tag = 'smem constant byte address 0x4 - core index']
  #allocation1 [shape = 'u32[144,128]{1,0:T(1,128)}', space=vmem, size = 0x12000, scoped, tag = 'internal scratch']
  %s0 = inlined_call_operand.vmem [shape: f32[8,32], index: 0, kind: input, shape index: {}]
  %s1 = inlined_call_operand.vmem [shape: bf16[32,256], index: 1, kind: input, shape index: {}]
  %s2 = inlined_call_operand.vmem [shape: f32[1,256], index: 2, kind: input, shape index: {}]
  %s3 = inlined_call_operand.hbm [shape: bf16[256,8], index: 3, kind: input, shape index: {}]
  %s4 = inlined_call_operand.vmem [shape: f32[1,8], index: 4, kind: input, shape index: {}]
  %s5 = inlined_call_operand.hbm [shape: f32[8,8], index: 5, kind: output, shape index: {}]
  %s6 = sld [smem:[#allocation0]]
  $region34: #{forward.1} parent=0
    _
  %s8 = ssub.s32 1, %s6
  %s9 = scalar_select 0, %s8, %s6
  $region1: #{forward.1} parent=0
    #allocation2 [shape = 'u8[65536]{0}', space=vmem, size = 0x10000, scoped, tag = 'input window, operand 3, single buffered']
    #allocation3 [shape = 's32[1]{0}', space=sflag, size = 0x4, scoped, tag = 'scoped memory for forward.1']
    #allocation4 [shape = 's32[1]{0}', space=sflag, size = 0x4, scoped, tag = 'scoped memory for forward.1']
    #allocation5 [shape = 'u8[4096]{0}', space=vmem, size = 0x1000, scoped, tag = 'output window, operand 0, single buffered']
    %10 = vsyncpa [#allocation3], 0
    %11 = vsyncpa [#allocation4], 0
    // Predicated region
    $region2: #{forward.1} parent=1 // pred_check
      _
    $region3: #{forward.1} parent=1 // pred_check_branch
      %13 = sbr.rel (0) target = $region5
    $region4: #{forward.1} parent=1 // pred_region
      _
    $region5: #{forward.1} parent=1 // pred_fallthru
      _
    // Predicated region
    $region6: #{forward.1} parent=1 // pred_check
      _
    $region7: #{forward.1} parent=1 // pred_check_branch
      %15 = sbr.rel (0) target = $region9
    $region8: #{forward.1} parent=1 // pred_region
      _
    $region9: #{forward.1} parent=1 // pred_fallthru
      _
    // Predicated region
    $region10: #{forward.1} parent=1 // pred_check
      _
    $region11: #{forward.1} parent=1 // pred_check_branch
      %17 = sbr.rel (0) target = $region13
    $region12: #{forward.1} parent=1 // pred_region
      _
    $region13: #{forward.1} parent=1 // pred_fallthru
      _
    // Predicated region
    $region14: #{forward.1} parent=1 // pred_check
      _
    $region15: #{forward.1} parent=1 // pred_check_branch
      %19 = sbr.rel (0) target = $region17
    $region16: #{forward.1} parent=1 // pred_region
      %s21 = ssub.s32 2048, 2048
      %22 = vsyncadd [#allocation3], %s21
      %s23 = sshll.u32 [#allocation2], 4
      %s24 = int_to_ptr.vmem [resolvable:$true] %s23
      %29 = dma.hbm_to_vmem [thread:$0]  %s3, 2048, %s24, [#allocation3], 64, 64, 4
    $region17: #{forward.1} parent=1 // pred_fallthru
      _
    // Predicated region
    $region18: #{forward.1} parent=1 // pred_check
      _
    $region19: #{forward.1} parent=1 // pred_check_branch
      %31 = sbr.rel (0) target = $region21
    $region20: #{forward.1} parent=1 // pred_region
      _
    $region21: #{forward.1} parent=1 // pred_fallthru
      _
    // Predicated region
    $region22: #{forward.1} parent=1 // pred_check
      _
    $region23: #{forward.1} parent=1 // pred_check_branch
      %33 = sbr.rel (0) target = $region25
    $region24: #{forward.1} parent=1 // pred_region
      %34 = dma.done [#allocation3], 2048
    $region25: #{forward.1} parent=1 // pred_fallthru
      _
    %v36 = vld [vmem:[%s0] sm:$0xff]
    %v37 = vpack.c.bf16 %v36, %v36
    %v38 = vld [vmem:[%s1] sm:$0xff]
    %v39 = vld [vmem:[%s1 + $0x8] sm:$0xff]
    %v40 = vld [vmem:[%s1 + $0x10] sm:$0xff]
    %v41 = vld [vmem:[%s1 + $0x18] sm:$0xff]
    %v42 = vld [vmem:[%s2] sm:$0x3]
    %v44 = vlaneseq
    %v45 = vshrl.u32 %v44, 7
    %v46 = vsub.s32 0, %v45
    %v47 = vrot.slane %v42, %v46
    %v48 = vlaneseq
    %v49 = vshrl.u32 %v48, 7
    %v50 = vsub.s32 1, %v49
    %v51 = vrot.slane %v42, %v50
    %v58 = vunpack.c.l.b16 %v38
    %v59 = vunpack.c.h.b16 %v38
    %v60 = vunpack.c.l.b16 %v39
    %v61 = vunpack.c.h.b16 %v39
    %v62 = vunpack.c.l.b16 %v40
    %v63 = vunpack.c.h.b16 %v40
    %v64 = vunpack.c.l.b16 %v41
    %v65 = vunpack.c.h.b16 %v41
    %v66 = vpack.c.b16 %v60, %v58
    %v67 = vpack.c.b16 %v61, %v59
    %v68 = vpack.c.b16 %v64, %v62
    %v69 = vpack.c.b16 %v65, %v63
    %vm74 = vcmask 261120
    %v76 = vsel %vm74, %v37, 0
    %78 = vmatprep.subr.bf16.mxu0 %v67
    %79 = vmatpush1.bf16.msra.mxu0 %v66
    %80 = vmatprep.subr.bf16.mxu0 %v69
    %81 = vmatpush1.bf16.msra.mxu0 %v68
    %82 = vmatprep.subr.bf16.mxu0 0
    %83 = vmatpush1.bf16.msra.mxu0 0
    %84 = vmatprep.subr.bf16.mxu0 0
    %85 = vmatpush1.bf16.msra.mxu0 0
    %86 = vmatprep.subr.bf16.mxu0 0
    %87 = vmatpush1.bf16.msra.mxu0 0
    %88 = vmatprep.subr.bf16.mxu0 0
    %89 = vmatpush1.bf16.msra.mxu0 0
    %90 = vmatprep.subr.bf16.mxu0 0
    %91 = vmatpush1.bf16.msra.mxu0 0
    %92 = vmatprep.subr.bf16.mxu0 0
    %93 = vmatpush1.bf16.msra.mxu0 0
    %94 = vmatprep.subr.bf16.mxu0 0
    %95 = vmatpush1.bf16.msra.mxu0 0
    %96 = vmatprep.subr.bf16.mxu0 0
    %97 = vmatpush1.bf16.msra.mxu0 0
    %98 = vmatprep.subr.bf16.mxu0 0
    %99 = vmatpush1.bf16.msra.mxu0 0
    %100 = vmatprep.subr.bf16.mxu0 0
    %101 = vmatpush1.bf16.msra.mxu0 0
    %102 = vmatprep.subr.bf16.mxu0 0
    %103 = vmatpush1.bf16.msra.mxu0 0
    %104 = vmatprep.subr.bf16.mxu0 0
    %105 = vmatpush1.bf16.msra.mxu0 0
    %106 = vmatprep.subr.bf16.mxu0 0
    %107 = vmatpush1.bf16.msra.mxu0 0
    %108 = vmatprep.subr.bf16.mxu0 0
    %109 = vmatpush1.bf16.msra.mxu0 0
    %110 = vmatprep.mubr.bf16.mxu0 0
    %111 = vmatmul.mubr.bf16.gmra.mrb[0].mxu0 %v76
    %v112 = vpop.f32.mrb[0].mxu0
    %v113 = vadd.f32 %v47, %v112
    %v114 = vpop.f32.mrb[0].mxu0
    %v115 = vadd.f32 %v51, %v114
    %v116 = vpop.f32.mrb[0].mxu0
    %v117 = vpop.f32.mrb[0].mxu0
    %118 = vdwg.mxu0
    %v119 = vmax.f32 %v113, 0.0
    %v120 = vmax.f32 %v115, 0.0
    %v121 = vpack.c.bf16 %v119, %v119
    %v122 = vpack.c.bf16 %v120, %v120
    %v123 = vld [vmem:[#allocation2] sm:$0xf]
    %v124 = vld [vmem:[#allocation2 + $0x4] sm:$0xf]
    %v125 = vld [vmem:[#allocation2 + $0x8] sm:$0xf]
    %v126 = vld [vmem:[#allocation2 + $0xc] sm:$0xf]
    %v127 = vld [vmem:[#allocation2 + $0x10] sm:$0xf]
    %v128 = vld [vmem:[#allocation2 + $0x14] sm:$0xf]
    %v129 = vld [vmem:[#allocation2 + $0x18] sm:$0xf]
    %v130 = vld [vmem:[#allocation2 + $0x1c] sm:$0xf]
    %v131 = vld [vmem:[#allocation2 + $0x20] sm:$0xf]
    %v132 = vld [vmem:[#allocation2 + $0x24] sm:$0xf]
    %v133 = vld [vmem:[#allocation2 + $0x28] sm:$0xf]
    %v134 = vld [vmem:[#allocation2 + $0x2c] sm:$0xf]
    %v135 = vld [vmem:[#allocation2 + $0x30] sm:$0xf]
    %v136 = vld [vmem:[#allocation2 + $0x34] sm:$0xf]
    %v137 = vld [vmem:[#allocation2 + $0x38] sm:$0xf]
    %v138 = vld [vmem:[#allocation2 + $0x3c] sm:$0xf]
    %v139 = vld [vmem:[#allocation2 + $0x40] sm:$0xf]
    %v140 = vld [vmem:[#allocation2 + $0x44] sm:$0xf]
    %v141 = vld [vmem:[#allocation2 + $0x48] sm:$0xf]
    %v142 = vld [vmem:[#allocation2 + $0x4c] sm:$0xf]
    %v143 = vld [vmem:[#allocation2 + $0x50] sm:$0xf]
    %v144 = vld [vmem:[#allocation2 + $0x54] sm:$0xf]
    %v145 = vld [vmem:[#allocation2 + $0x58] sm:$0xf]
    %v146 = vld [vmem:[#allocation2 + $0x5c] sm:$0xf]
    %v147 = vld [vmem:[#allocation2 + $0x60] sm:$0xf]
    %v148 = vld [vmem:[#allocation2 + $0x64] sm:$0xf]
    %v149 = vld [vmem:[#allocation2 + $0x68] sm:$0xf]
    %v150 = vld [vmem:[#allocation2 + $0x6c] sm:$0xf]
    %v151 = vld [vmem:[#allocation2 + $0x70] sm:$0xf]
    %v152 = vld [vmem:[#allocation2 + $0x74] sm:$0xf]
    %v153 = vld [vmem:[#allocation2 + $0x78] sm:$0xf]
    %v154 = vld [vmem:[#allocation2 + $0x7c] sm:$0xf]
    %v155 = vld [vmem:[%s4] sm:$0x1]
    %v157 = vlaneseq
    %v158 = vshrl.u32 %v157, 7
    %v159 = vsub.s32 0, %v158
    %v160 = vrot.slane %v155, %v159
    %v194 = vunpack.c.l.b16 %v123
    %v195 = vunpack.c.l.b16 %v124
    %v196 = vunpack.c.l.b16 %v125
    %v197 = vunpack.c.l.b16 %v126
    %v198 = vunpack.c.l.b16 %v127
    %v199 = vunpack.c.l.b16 %v128
    %v200 = vunpack.c.l.b16 %v129
    %v201 = vunpack.c.l.b16 %v130
    %v202 = vunpack.c.l.b16 %v131
    %v203 = vunpack.c.l.b16 %v132
    %v204 = vunpack.c.l.b16 %v133
    %v205 = vunpack.c.l.b16 %v134
    %v206 = vunpack.c.l.b16 %v135
    %v207 = vunpack.c.l.b16 %v136
    %v208 = vunpack.c.l.b16 %v137
    %v209 = vunpack.c.l.b16 %v138
    %v210 = vunpack.c.l.b16 %v139
    %v211 = vunpack.c.l.b16 %v140
    %v212 = vunpack.c.l.b16 %v141
    %v213 = vunpack.c.l.b16 %v142
    %v214 = vunpack.c.l.b16 %v143
    %v215 = vunpack.c.l.b16 %v144
    %v216 = vunpack.c.l.b16 %v145
    %v217 = vunpack.c.l.b16 %v146
    %v218 = vunpack.c.l.b16 %v147
    %v219 = vunpack.c.l.b16 %v148
    %v220 = vunpack.c.l.b16 %v149
    %v221 = vunpack.c.l.b16 %v150
    %v222 = vunpack.c.l.b16 %v151
    %v223 = vunpack.c.l.b16 %v152
    %v224 = vunpack.c.l.b16 %v153
    %v225 = vunpack.c.l.b16 %v154
    %v226 = vpack.c.b16 %v195, %v194
    %v227 = vpack.c.b16 %v197, %v196
    %v228 = vpack.c.b16 %v199, %v198
    %v229 = vpack.c.b16 %v201, %v200
    %v230 = vpack.c.b16 %v203, %v202
    %v231 = vpack.c.b16 %v205, %v204
    %v232 = vpack.c.b16 %v207, %v206
    %v233 = vpack.c.b16 %v209, %v208
    %v234 = vpack.c.b16 %v211, %v210
    %v235 = vpack.c.b16 %v213, %v212
    %v236 = vpack.c.b16 %v215, %v214
    %v237 = vpack.c.b16 %v217, %v216
    %v238 = vpack.c.b16 %v219, %v218
    %v239 = vpack.c.b16 %v221, %v220
    %v240 = vpack.c.b16 %v223, %v222
    %v241 = vpack.c.b16 %v225, %v224
    %258 = vmatprep.subr.bf16.mxu0 0
    %259 = vmatpush1.bf16.msra.mxu0 %v226
    %260 = vmatprep.subr.bf16.mxu0 0
    %261 = vmatpush1.bf16.msra.mxu0 %v227
    %262 = vmatprep.subr.bf16.mxu0 0
    %263 = vmatpush1.bf16.msra.mxu0 %v228
    %264 = vmatprep.subr.bf16.mxu0 0
    %265 = vmatpush1.bf16.msra.mxu0 %v229
    %266 = vmatprep.subr.bf16.mxu0 0
    %267 = vmatpush1.bf16.msra.mxu0 %v230
    %268 = vmatprep.subr.bf16.mxu0 0
    %269 = vmatpush1.bf16.msra.mxu0 %v231
    %270 = vmatprep.subr.bf16.mxu0 0
    %271 = vmatpush1.bf16.msra.mxu0 %v232
    %272 = vmatprep.subr.bf16.mxu0 0
    %273 = vmatpush1.bf16.msra.mxu0 %v233
    %274 = vmatprep.subr.bf16.mxu0 0
    %275 = vmatpush1.bf16.msra.mxu0 %v234
    %276 = vmatprep.subr.bf16.mxu0 0
    %277 = vmatpush1.bf16.msra.mxu0 %v235
    %278 = vmatprep.subr.bf16.mxu0 0
    %279 = vmatpush1.bf16.msra.mxu0 %v236
    %280 = vmatprep.subr.bf16.mxu0 0
    %281 = vmatpush1.bf16.msra.mxu0 %v237
    %282 = vmatprep.subr.bf16.mxu0 0
    %283 = vmatpush1.bf16.msra.mxu0 %v238
    %284 = vmatprep.subr.bf16.mxu0 0
    %285 = vmatpush1.bf16.msra.mxu0 %v239
    %286 = vmatprep.subr.bf16.mxu0 0
    %287 = vmatpush1.bf16.msra.mxu0 %v240
    %288 = vmatprep.subr.bf16.mxu0 0
    %289 = vmatpush1.bf16.msra.mxu0 %v241
    %290 = vmatprep.mubr.bf16.mxu0 %v122
    %291 = vmatmul.mubr.bf16.gmra.mrb[0].mxu0 %v121
    %v292 = vpop.f32.mrb[0].mxu0
    %v293 = vadd.f32 %v160, %v292
    %v294 = vpop.f32.mrb[0].mxu0
    %v295 = vpop.f32.mrb[0].mxu0
    %v296 = vpop.f32.mrb[0].mxu0
    %297 = vdwg.mxu0
    %vm298 = vcmask 64512
    %299 = vst.msk [vmem:[#allocation5] sm:$0xff] %vm298, %v293
    // Predicated region
    $region26: #{forward.1} parent=1 // pred_check
      _
    $region27: #{forward.1} parent=1 // pred_check_branch
      %301 = sbr.rel (0) target = $region29
    $region28: #{forward.1} parent=1 // pred_region
      %s303 = ssub.s32 128, 128
      %304 = vsyncadd [#allocation4], %s303
      %s306 = sshll.u32 [#allocation5], 4
      %s307 = int_to_ptr.vmem [resolvable:$true] %s306
      %309 = dma.vmem_to_hbm [thread:$0]  %s307, 128, %s5, [#allocation4]
    $region29: #{forward.1} parent=1 // pred_fallthru
      _
    // Predicated region
    $region30: #{forward.1} parent=1 // pred_check
      _
    $region31: #{forward.1} parent=1 // pred_check_branch
      %311 = sbr.rel (0) target = $region33
    $region32: #{forward.1} parent=1 // pred_region
      %312 = dma.done [#allocation4], 128
    $region33: #{forward.1} parent=1 // pred_fallthru
      _
    %313 = vsyncpa [#allocation3], 1
    %314 = vsyncpa [#allocation4], 1

</llo_original>
